<compile_context>
chip_gen: v5e
topology: v5e:2x2
jax: 0.10.0
libtpu: 0.0.40
codegen_flags: <defaults>
</compile_context>

<pallas_src>
import jax
import jax.numpy as jnp
import numpy as np
from jax.experimental import pallas as pl
from jax.experimental.pallas import tpu as pltpu

_MAX_TILE_K = 16384        # multiple of 128 whenever it is smaller than K
_LANE_BUDGET = 131072      # bt * tk cap -> live VMEM = 192 * bt * tk ~= 24 MiB
_MAX_TILE_M = 8192         # multiple of 8 whenever it is smaller than M
_VMEM_LIMIT_BYTES = 32 * 1024 * 1024   # explicit (v5e scoped default is only 16 MiB)


def _cross_bk_kernel(x_ref, y_ref, o_ref):
    """cross(x, y) over axis 1 of a (bt, 3, tk) tile (pure VPU elementwise)."""
    a = x_ref[...]
    b = y_ref[...]
    a0, a1, a2 = a[:, 0:1, :], a[:, 1:2, :], a[:, 2:3, :]
    b0, b1, b2 = b[:, 0:1, :], b[:, 1:2, :], b[:, 2:3, :]
    # Three direct sub-row stores instead of a concatenate along the 3-axis.
    o_ref[:, 0:1, :] = a1 * b2 - a2 * b1
    o_ref[:, 1:2, :] = a2 * b0 - a0 * b2
    o_ref[:, 2:3, :] = a0 * b1 - a1 * b0


def cross_bk(x, y):
    """cross over axis 1 of (B, 3, K) arrays, streamed through VMEM."""
    assert x.shape == y.shape and x.ndim == 3 and x.shape[1] == 3
    B, _, K = x.shape

    # Pick the largest (bt, tk) that stays inside the VMEM budget.
    tk = K if K <= _MAX_TILE_K else _MAX_TILE_K      # multiple of 128 when < K
    bt = min(B, max(1, _LANE_BUDGET // tk))
    grid = (pl.cdiv(B, bt), pl.cdiv(K, tk))

    spec = pl.BlockSpec((bt, 3, tk), lambda i, j: (i, 0, j))
    return pl.pallas_call(
        _cross_bk_kernel,
        grid=grid,
        in_specs=[spec, spec],
        out_specs=spec,
        out_shape=jax.ShapeDtypeStruct((B, 3, K), x.dtype),
        compiler_params=pltpu.CompilerParams(
            # Batch tiles are fully independent -> shard across v7x's two
            # TensorCores; keep the K stream sequential on each core.
            dimension_semantics=("parallel", "arbitrary"),
            vmem_limit_bytes=_VMEM_LIMIT_BYTES,
        ),
    )(x, y)


def _cross_rows_kernel(z_ref, w_ref, o_ref):
    """cross(z, w) over axis 1 of a (tm, 3) tile."""
    z = z_ref[...]
    w = w_ref[...]
    z0, z1, z2 = z[:, 0:1], z[:, 1:2], z[:, 2:3]
    w0, w1, w2 = w[:, 0:1], w[:, 1:2], w[:, 2:3]
    o_ref[...] = jnp.concatenate(
        [z1 * w2 - z2 * w1,
         z2 * w0 - z0 * w2,
         z0 * w1 - z1 * w0], axis=1)


def cross_rows(z, w):
    """cross over axis 1 of (M, 3) arrays, tiled over M."""
    assert z.shape == w.shape and z.ndim == 2 and z.shape[1] == 3
    M, _ = z.shape
    tm = M if M <= _MAX_TILE_M else _MAX_TILE_M      # multiple of 8 when < M
    grid = (pl.cdiv(M, tm),)
    spec = pl.BlockSpec((tm, 3), lambda i: (i, 0))
    # TODO(synk): for very large M, a lane-dense (3, M) presentation would avoid
    # the 3-lane (lane-padded) blocks and masked output stores of this layout.
    return pl.pallas_call(
        _cross_rows_kernel,
        grid=grid,
        in_specs=[spec, spec],
        out_specs=spec,
        out_shape=jax.ShapeDtypeStruct((M, 3), z.dtype),
        compiler_params=pltpu.CompilerParams(
            dimension_semantics=("parallel",)),
    )(z, w)


def model_forward(x, y, z, w):
    # torch.cross with no `dim` uses the first size-3 axis (legacy default).
    # For these layouts that is axis 1 for both pairs, so out0 and out1 are the
    # identical computation -> compute once, return twice.
    default_dim_x = next(i for i, s in enumerate(x.shape) if s == 3)
    default_dim_z = next(i for i, s in enumerate(z.shape) if s == 3)
    # TODO(synk): a leading size-3 axis (default dim 0) would need a layout-
    # specific kernel path; fail loudly rather than compute the wrong dim.
    assert default_dim_x == 1 and default_dim_z == 1
    out_xy = cross_bk(x, y)
    out_zw = cross_rows(z, w)
    return out_xy, out_xy, out_zw


if __name__ == "__main__":
    key = jax.random.PRNGKey(0)
    kx, ky, kz, kw = jax.random.split(key, 4)
    x = jax.random.uniform(kx, (2, 3, 16), dtype=jnp.float32)
    y = jax.random.uniform(ky, (2, 3, 16), dtype=jnp.float32)
    z = jax.random.uniform(kz, (5, 3), dtype=jnp.float32)
    w = jax.random.uniform(kw, (5, 3), dtype=jnp.float32)

    out0, out1, out2 = jax.block_until_ready(model_forward(x, y, z, w))

    # reference check against jnp.cross
    ref_xy = jnp.cross(x, y, axis=1)
    ref_zw = jnp.cross(z, w, axis=1)
    assert out0.shape == x.shape and out1.shape == x.shape and out2.shape == z.shape
    assert np.allclose(np.asarray(out0), np.asarray(ref_xy), atol=1e-6)
    assert np.allclose(np.asarray(out1), np.asarray(ref_xy), atol=1e-6)
    assert np.allclose(np.asarray(out2), np.asarray(ref_zw), atol=1e-6)

    print("KERNEL_OK")
</pallas_src>

<mosaic_0001>
module attributes {stable_mosaic.version = 11 : i64} {
  func.func @_cross_bk_kernel(%arg0: i32, %arg1: i32, %arg2: memref<2x3x16xf32, #tpu.memory_space<vmem>>, %arg3: memref<2x3x16xf32, #tpu.memory_space<vmem>>, %arg4: memref<2x3x16xf32, #tpu.memory_space<vmem>>) attributes {dimension_semantics = [#tpu.dimension_semantics<parallel>, #tpu.dimension_semantics<arbitrary>], iteration_bounds = array<i64: 1, 1>, scalar_prefetch = 0 : i64, scratch_operands = 0 : i64, tpu.core_type = #tpu.core_type<tc>, window_params = [{transform_indices = @transform_0, window_bounds = array<i64: 2, 3, 16>}, {transform_indices = @transform_1, window_bounds = array<i64: 2, 3, 16>}, {transform_indices = @transform_2, window_bounds = array<i64: 2, 3, 16>}]} {
    %c0 = arith.constant 0 : index
    %c0_0 = arith.constant 0 : index
    %c0_1 = arith.constant 0 : index
    %0 = vector.load %arg2[%c0, %c0_0, %c0_1] : memref<2x3x16xf32, #tpu.memory_space<vmem>>, vector<2x3x16xf32>
    %c0_2 = arith.constant 0 : index
    %c0_3 = arith.constant 0 : index
    %c0_4 = arith.constant 0 : index
    %1 = vector.load %arg3[%c0_2, %c0_3, %c0_4] : memref<2x3x16xf32, #tpu.memory_space<vmem>>, vector<2x3x16xf32>
    %2 = vector.extract_strided_slice %0 {offsets = [0, 0, 0], sizes = [2, 1, 16], strides = [1, 1, 1]} : vector<2x3x16xf32> to vector<2x1x16xf32>
    %3 = vector.extract_strided_slice %0 {offsets = [0, 1, 0], sizes = [2, 1, 16], strides = [1, 1, 1]} : vector<2x3x16xf32> to vector<2x1x16xf32>
    %4 = vector.extract_strided_slice %0 {offsets = [0, 2, 0], sizes = [2, 1, 16], strides = [1, 1, 1]} : vector<2x3x16xf32> to vector<2x1x16xf32>
    %5 = vector.extract_strided_slice %1 {offsets = [0, 0, 0], sizes = [2, 1, 16], strides = [1, 1, 1]} : vector<2x3x16xf32> to vector<2x1x16xf32>
    %6 = vector.extract_strided_slice %1 {offsets = [0, 1, 0], sizes = [2, 1, 16], strides = [1, 1, 1]} : vector<2x3x16xf32> to vector<2x1x16xf32>
    %7 = vector.extract_strided_slice %1 {offsets = [0, 2, 0], sizes = [2, 1, 16], strides = [1, 1, 1]} : vector<2x3x16xf32> to vector<2x1x16xf32>
    %8 = arith.mulf %3, %7 : vector<2x1x16xf32>
    %9 = arith.mulf %4, %6 : vector<2x1x16xf32>
    %10 = arith.subf %8, %9 : vector<2x1x16xf32>
    %c0_5 = arith.constant 0 : index
    %c0_6 = arith.constant 0 : index
    %c0_7 = arith.constant 0 : index
    %11 = vector.load %arg4[%c0_5, %c0_6, %c0_7] : memref<2x3x16xf32, #tpu.memory_space<vmem>>, vector<2x1x16xf32>
    tpu.vector_store %arg4[%c0_5, %c0_6, %c0_7], %10 {strides = array<i32>} : memref<2x3x16xf32, #tpu.memory_space<vmem>>, vector<2x1x16xf32>,
    %12 = arith.mulf %4, %5 : vector<2x1x16xf32>
    %13 = arith.mulf %2, %7 : vector<2x1x16xf32>
    %14 = arith.subf %12, %13 : vector<2x1x16xf32>
    %c0_8 = arith.constant 0 : index
    %c1 = arith.constant 1 : index
    %c0_9 = arith.constant 0 : index
    %15 = vector.load %arg4[%c0_8, %c1, %c0_9] : memref<2x3x16xf32, #tpu.memory_space<vmem>>, vector<2x1x16xf32>
    tpu.vector_store %arg4[%c0_8, %c1, %c0_9], %14 {strides = array<i32>} : memref<2x3x16xf32, #tpu.memory_space<vmem>>, vector<2x1x16xf32>,
    %16 = arith.mulf %2, %6 : vector<2x1x16xf32>
    %17 = arith.mulf %3, %5 : vector<2x1x16xf32>
    %18 = arith.subf %16, %17 : vector<2x1x16xf32>
    %c0_10 = arith.constant 0 : index
    %c2 = arith.constant 2 : index
    %c0_11 = arith.constant 0 : index
    %19 = vector.load %arg4[%c0_10, %c2, %c0_11] : memref<2x3x16xf32, #tpu.memory_space<vmem>>, vector<2x1x16xf32>
    tpu.vector_store %arg4[%c0_10, %c2, %c0_11], %18 {strides = array<i32>} : memref<2x3x16xf32, #tpu.memory_space<vmem>>, vector<2x1x16xf32>,
    return
  }
  func.func @transform_0(%arg0: i32, %arg1: i32) -> (i32, i32, i32) {
    %c0_i32 = arith.constant 0 : i32
    %c0_i32_0 = arith.constant 0 : i32
    return %arg0, %c0_i32, %arg1 : i32, i32, i32
  }
  func.func @transform_1(%arg0: i32, %arg1: i32) -> (i32, i32, i32) {
    %c0_i32 = arith.constant 0 : i32
    %c0_i32_0 = arith.constant 0 : i32
    return %arg0, %c0_i32, %arg1 : i32, i32, i32
  }
  func.func @transform_2(%arg0: i32, %arg1: i32) -> (i32, i32, i32) {
    %c0_i32 = arith.constant 0 : i32
    %c0_i32_0 = arith.constant 0 : i32
    return %arg0, %c0_i32, %arg1 : i32, i32, i32
  }
}

</mosaic_0001>

<llo_original>
// kernel: tpu_custom_call.1
$region0: #{tpu_custom_call.1}
  #allocation0 [shape = 'u32[]', space=smem, size = 0x4, offset = 0x4, fixed_abs, tag = 'smem constant byte address 0x4 - core index']
  #allocation1 [shape = 'u32[72,128]{1,0:T(1,128)}', space=vmem, size = 0x9000, scoped, tag = 'internal scratch']
  %s0 = inlined_call_operand.vmem [shape: f32[2,3,16], index: 0, kind: input, shape index: {}]
  %s1 = inlined_call_operand.vmem [shape: f32[2,3,16], index: 1, kind: input, shape index: {}]
  %s2 = inlined_call_operand.vmem [shape: f32[2,3,16], index: 2, kind: output, shape index: {}]
  %s3 = sld [smem:[#allocation0]]
  $region18: #{tpu_custom_call.1} parent=0
    _
  %s5 = ssub.s32 1, %s3
  %s6 = scalar_select 0, %s5, %s3
  // Predicated region
  $region2: #{tpu_custom_call.1} parent=0 // pred_check
    _
  $region3: #{tpu_custom_call.1} parent=0 // pred_check_branch
    %8 = sbr.rel (0) target = $region5
  $region4: #{tpu_custom_call.1} parent=0 // pred_region
    _
  $region5: #{tpu_custom_call.1} parent=0 // pred_fallthru
    _
  // Predicated region
  $region6: #{tpu_custom_call.1} parent=0 // pred_check
    _
  $region7: #{tpu_custom_call.1} parent=0 // pred_check_branch
    %10 = sbr.rel (0) target = $region9
  $region8: #{tpu_custom_call.1} parent=0 // pred_region
    _
  $region9: #{tpu_custom_call.1} parent=0 // pred_fallthru
    _
  %v11 = vld [vmem:[%s0] sm:$0x7]
  %v12 = vld [vmem:[%s0 + $0x4] sm:$0x7]
  %v13 = vld [vmem:[%s1] sm:$0x7]
  %v14 = vld [vmem:[%s1 + $0x4] sm:$0x7]
  %v17 = vrot.slane %v13, 1
  %v18 = vrot.slane %v14, 1
  %v21 = vmul.f32 %v11, %v17
  %v22 = vmul.f32 %v12, %v18
  %v23 = vrot.slane %v13, 7
  %v24 = vrot.slane %v14, 7
  %v27 = vmul.f32 %v11, %v23
  %v28 = vmul.f32 %v12, %v24
  %v31 = vrot.slane %v27, 1
  %v32 = vrot.slane %v28, 1
  %v35 = vsub.f32 %v21, %v31
  %v36 = vsub.f32 %v22, %v32
  %vm37 = vcmask 123905
  %38 = vst.msk [vmem:[%s2 - $0x1] sm:$0x2] %vm37, %v35
  %39 = vst.msk [vmem:[%s2 + $0x3] sm:$0x2] %vm37, %v36
  %v40 = vrot.slane %v13, 6
  %v41 = vrot.slane %v14, 6
  %v44 = vmul.f32 %v11, %v40
  %v45 = vmul.f32 %v12, %v41
  %v46 = vrot.slane %v13, 2
  %v47 = vrot.slane %v14, 2
  %v50 = vmul.f32 %v11, %v46
  %v51 = vmul.f32 %v12, %v47
  %v54 = vrot.slane %v50, 6
  %v55 = vrot.slane %v51, 6
  %v58 = vsub.f32 %v44, %v54
  %v59 = vsub.f32 %v45, %v55
  %vm60 = vcmask 124930
  %61 = vst.msk [vmem:[%s2 - $0x1] sm:$0x4] %vm60, %v58
  %62 = vst.msk [vmem:[%s2 + $0x3] sm:$0x4] %vm60, %v59
  %vm63 = vcmask 122880
  %64 = vst.msk [vmem:[%s2 + $0x2] sm:$0x1] %vm63, %v35
  %65 = vst.msk [vmem:[%s2 + $0x6] sm:$0x1] %vm63, %v36
  // Predicated region
  $region10: #{tpu_custom_call.1} parent=0 // pred_check
    _
  $region11: #{tpu_custom_call.1} parent=0 // pred_check_branch
    %67 = sbr.rel (0) target = $region13
  $region12: #{tpu_custom_call.1} parent=0 // pred_region
    _
  $region13: #{tpu_custom_call.1} parent=0 // pred_fallthru
    _
  // Predicated region
  $region14: #{tpu_custom_call.1} parent=0 // pred_check
    _
  $region15: #{tpu_custom_call.1} parent=0 // pred_check_branch
    %69 = sbr.rel (0) target = $region17
  $region16: #{tpu_custom_call.1} parent=0 // pred_region
    _
  $region17: #{tpu_custom_call.1} parent=0 // pred_fallthru
    _

</llo_original>
